<compile_context>
chip_gen: v6e
topology: v6e:2x2x1
jax: 0.10.0
libtpu: 0.0.40
codegen_flags: <defaults>
</compile_context>

<pallas_src>
import jax
import jax.numpy as jnp
from jax.experimental import pallas as pl
from jax.experimental.pallas import tpu as pltpu

ZSIZE = 16         # hidden size
IN_DIM = 64        # d1 input features
NGATE = 3 * ZSIZE  # kept gates per LSTM layer: i, g, o (f-gate dropped)

# b_slab row layout (single f32 column, resident in VMEM):
_B_BD1 = 0                       # [0:16)    d1 bias
_B_B0 = _B_BD1 + ZSIZE           # [16:64)   layer-0 gate bias (i,g,o), b_ih+b_hh
_B_B1 = _B_B0 + NGATE            # [64:112)  layer-1 gate bias (i,g,o), b_ih+b_hh
_B_WD6 = _B_B1 + NGATE           # [112:128) d6 weight as a column
_B_BD6 = _B_WD6 + ZSIZE          # [128]     d6 bias
B_ROWS = _B_BD6 + 1              # 129


def _sigmoid(x):
    # sigmoid(x) == 0.5*tanh(0.5*x) + 0.5 : one EUP op instead of exp+recip.
    return 0.5 * jnp.tanh(0.5 * x) + 0.5


def action_predicter_kernel(x_ref, wd1_ref, w_ref, b_ref, out_ref):
    # x_ref   : (TB, 64) f32    -- batch tile in natural HBM layout
    # wd1_ref : (16, 64) bf16   -- d1 weight (out_features, in_features), resident
    # w_ref   : (96, 16) bf16   -- [0:48]=Wih0(i,g,o) [48:96]=Wih1(i,g,o), resident
    # b_ref   : (129, 1) f32    -- bias/wd6 slab (see layout above), resident
    # out_ref : (1, TB)  f32    -- lane-dense output tile
    bd1 = b_ref[_B_BD1:_B_BD1 + ZSIZE, :]        # (16, 1)
    b0 = b_ref[_B_B0:_B_B0 + NGATE, :]           # (48, 1)
    b1 = b_ref[_B_B1:_B_B1 + NGATE, :]           # (48, 1)
    wd6_col = b_ref[_B_WD6:_B_WD6 + ZSIZE, :]    # (16, 1)
    bd6 = b_ref[_B_BD6:_B_BD6 + 1, :]            # (1, 1)

    # ---- layout: batch onto the lane axis, bf16 for the MXU input path ----
    x_t = x_ref[...].T.astype(jnp.bfloat16)      # (64, TB) bf16 (XLU transpose)

    # ---- d1 + ReLU : (16,64)bf16 @ (64,TB)bf16 -> (16,TB)f32 ----
    h_in = jnp.dot(wd1_ref[...], x_t, preferred_element_type=jnp.float32) + bd1
    h_in = jnp.maximum(h_in, 0.0)

    # ---- LSTM layer 0 (single step, h0=c0=0; only i/g/o gates kept) ----
    w0 = w_ref[0:NGATE, :]                                            # (48,16) bf16
    g0 = jnp.dot(w0, h_in.astype(jnp.bfloat16),
                 preferred_element_type=jnp.float32) + b0             # (48, TB) f32
    i0 = _sigmoid(g0[0:ZSIZE, :])
    gg0 = jnp.tanh(g0[ZSIZE:2 * ZSIZE, :])
    o0 = _sigmoid(g0[2 * ZSIZE:3 * ZSIZE, :])
    h0 = o0 * jnp.tanh(i0 * gg0)                                      # (16, TB) f32

    # ---- LSTM layer 1 (input = h0) == hidden[-2] of the 3-layer LSTM ----
    w1 = w_ref[NGATE:2 * NGATE, :]                                    # (48,16) bf16
    g1 = jnp.dot(w1, h0.astype(jnp.bfloat16),
                 preferred_element_type=jnp.float32) + b1             # (48, TB) f32
    i1 = _sigmoid(g1[0:ZSIZE, :])
    gg1 = jnp.tanh(g1[ZSIZE:2 * ZSIZE, :])
    o1 = _sigmoid(g1[2 * ZSIZE:3 * ZSIZE, :])
    h1 = o1 * jnp.tanh(i1 * gg1)                                      # (16, TB) f32

    # ---- d6 + tanh : VPU multiply by (16,1) column + sublane sum (XLU) ----
    y = jnp.sum(wd6_col * h1, axis=0, keepdims=True) + bd6            # (1, TB)
    out_ref[...] = jnp.tanh(y)


def init_params(key):
    """Deterministic PyTorch-style uniform(-1/sqrt(fan_in)) init (PyTorch layouts)."""
    ks = jax.random.split(key, 10)

    def unif(k, shape, fan_in):
        bound = 1.0 / jnp.sqrt(float(fan_in))
        return jax.random.uniform(k, shape, jnp.float32, -bound, bound)

    return dict(
        wd1=unif(ks[0], (ZSIZE, IN_DIM), IN_DIM),       # d1: Linear(64,16)
        bd1=unif(ks[1], (ZSIZE,), IN_DIM),
        wih0=unif(ks[2], (4 * ZSIZE, ZSIZE), ZSIZE),    # lstm1 layer 0
        bih0=unif(ks[3], (4 * ZSIZE,), ZSIZE),
        bhh0=unif(ks[4], (4 * ZSIZE,), ZSIZE),
        wih1=unif(ks[5], (4 * ZSIZE, ZSIZE), ZSIZE),    # lstm1 layer 1
        bih1=unif(ks[6], (4 * ZSIZE,), ZSIZE),
        bhh1=unif(ks[7], (4 * ZSIZE,), ZSIZE),
        wd6=unif(ks[8], (1, ZSIZE), ZSIZE),             # d6: Linear(16,1)
        bd6=unif(ks[9], (1,), ZSIZE),
    )


def pack_params(p):
    """Pack PyTorch-layout params into the 3 resident kernel slabs (i,g,o gates only)."""
    def keep_igo(a):  # drop dead forget-gate rows (c_prev = 0)
        return jnp.concatenate(
            [a[0:ZSIZE], a[2 * ZSIZE:3 * ZSIZE], a[3 * ZSIZE:4 * ZSIZE]], axis=0)

    wih0_k = keep_igo(p["wih0"])                      # (48, 16)
    wih1_k = keep_igo(p["wih1"])                      # (48, 16)
    b0_k = keep_igo(p["bih0"] + p["bhh0"])            # (48,)
    b1_k = keep_igo(p["bih1"] + p["bhh1"])            # (48,)

    # bf16 matmul inputs (MXU native path); biases / wd6 column stay f32.
    w_slab = jnp.concatenate([wih0_k, wih1_k], axis=0).astype(jnp.bfloat16)  # (96, 16)

    b_slab = jnp.zeros((B_ROWS, 1), jnp.float32)
    b_slab = b_slab.at[_B_BD1:_B_BD1 + ZSIZE, 0].set(p["bd1"])
    b_slab = b_slab.at[_B_B0:_B_B0 + NGATE, 0].set(b0_k)
    b_slab = b_slab.at[_B_B1:_B_B1 + NGATE, 0].set(b1_k)
    b_slab = b_slab.at[_B_WD6:_B_WD6 + ZSIZE, 0].set(p["wd6"][0])
    b_slab = b_slab.at[_B_BD6, 0].set(p["bd6"][0])

    return dict(
        wd1_bf16=p["wd1"].astype(jnp.bfloat16),       # (16, 64)
        w_slab=w_slab,                                # (96, 16) bf16
        b_slab=b_slab,                                # (129, 1) f32
    )


def _pick_tb(batch, max_tb=4096, min_tb=256, target_tiles=4):
    """Tile multiple of 256 lanes; large to amortize per-step overhead, but small
    enough that there are >=2 grid steps for v7x's two TensorCores."""
    t = -(-batch // target_tiles)          # cdiv
    t = ((t + 255) // 256) * 256           # round up to 256 lanes
    return max(min_tb, min(max_tb, t))


def action_predicter_forward(x, packed, *, tb=None):
    """x: (B, 64) f32 -> (1, B, 1) f32."""
    B = x.shape[0]
    if tb is None:
        tb = _pick_tb(B)
    n_tiles = pl.cdiv(B, tb)

    out = pl.pallas_call(
        action_predicter_kernel,
        out_shape=jax.ShapeDtypeStruct((1, B), jnp.float32),
        grid=(n_tiles,),
        in_specs=[
            # x streamed in its natural (B, 64) f32 layout; ragged last tile
            # is handled by the grid (OOB lanes produce garbage that only ever
            # flows through per-lane math and is masked off at the store).
            pl.BlockSpec((tb, IN_DIM), lambda i: (i, 0)),
            # Resident (constant index_map => DMA'd once) weight/bias slabs.
            # TODO(synk): pipeline_mode=pl.Buffered(1) on these would save two
            # tiny VMEM buffers; left at the default for portability.
            pl.BlockSpec((ZSIZE, IN_DIM), lambda i: (0, 0)),       # wd1 bf16
            pl.BlockSpec((2 * NGATE, ZSIZE), lambda i: (0, 0)),    # w slab bf16
            pl.BlockSpec((B_ROWS, 1), lambda i: (0, 0)),           # b slab f32
        ],
        out_specs=pl.BlockSpec((1, tb), lambda i: (0, i)),         # lane-dense
        compiler_params=pltpu.CompilerParams(
            dimension_semantics=("parallel",)),                    # 2 TCs on v7x
    )(x, packed["wd1_bf16"], packed["w_slab"], packed["b_slab"])

    return out.T[None, :, :]    # (1, B, 1) to mirror tanh(d6(hidden[-2:-1, :]))


def reference_forward(p, x):
    """Pure-JAX reference (bf16 rounding on matmul inputs, like the kernel)."""
    xb = x.astype(jnp.bfloat16).astype(jnp.float32)
    wd1b = p["wd1"].astype(jnp.bfloat16).astype(jnp.float32)
    h = jnp.maximum(xb @ wd1b.T + p["bd1"], 0.0)

    def lstm_layer(h, wih, bih, bhh):
        hb = h.astype(jnp.bfloat16).astype(jnp.float32)
        wb = wih.astype(jnp.bfloat16).astype(jnp.float32)
        g = hb @ wb.T + (bih + bhh)
        i = jax.nn.sigmoid(g[:, 0:ZSIZE])
        gg = jnp.tanh(g[:, 2 * ZSIZE:3 * ZSIZE])
        o = jax.nn.sigmoid(g[:, 3 * ZSIZE:4 * ZSIZE])
        return o * jnp.tanh(i * gg)

    h0 = lstm_layer(h, p["wih0"], p["bih0"], p["bhh0"])
    h1 = lstm_layer(h0, p["wih1"], p["bih1"], p["bhh1"])
    y = jnp.tanh(h1 @ p["wd6"].T + p["bd6"])          # (B, 1)
    return y[None, :, :]                              # (1, B, 1)


if __name__ == "__main__":
    key = jax.random.PRNGKey(0)
    k_param, k_x = jax.random.split(key)

    params = init_params(k_param)
    packed = pack_params(params)

    B = 300  # exercises a 2-step grid (tb=256) and the ragged last tile, unpadded
    x = jax.random.normal(k_x, (B, IN_DIM), dtype=jnp.float32)

    out = action_predicter_forward(x, packed)
    jax.block_until_ready(out)
    assert out.shape == (1, B, 1), out.shape

    ref = reference_forward(params, x)
    assert jnp.allclose(out, ref, atol=1e-2, rtol=1e-2), \
        float(jnp.max(jnp.abs(out - ref)))

    print("KERNEL_OK")
</pallas_src>

<mosaic_0001>
module attributes {stable_mosaic.version = 11 : i64} {
  func.func @action_predicter_kernel(%arg0: i32, %arg1: memref<256x64xf32, #tpu.memory_space<vmem>>, %arg2: memref<16x64xbf16, #tpu.memory_space<vmem>>, %arg3: memref<96x16xbf16, #tpu.memory_space<vmem>>, %arg4: memref<129x1xf32, #tpu.memory_space<vmem>>, %arg5: memref<1x256xf32, #tpu.memory_space<vmem>>) attributes {dimension_semantics = [#tpu.dimension_semantics<parallel>], iteration_bounds = array<i64: 2>, scalar_prefetch = 0 : i64, scratch_operands = 0 : i64, tpu.core_type = #tpu.core_type<tc>, window_params = [{transform_indices = @transform_0, window_bounds = array<i64: 256, 64>}, {pipeline_mode = #tpu.pipeline_mode<synchronous>, transform_indices = @transform_1, window_bounds = array<i64: 16, 64>}, {pipeline_mode = #tpu.pipeline_mode<synchronous>, transform_indices = @transform_2, window_bounds = array<i64: 96, 16>}, {pipeline_mode = #tpu.pipeline_mode<synchronous>, transform_indices = @transform_3, window_bounds = array<i64: 129, 1>}, {transform_indices = @transform_4, window_bounds = array<i64: 1, 256>}]} {
    %c0 = arith.constant 0 : index
    %c0_0 = arith.constant 0 : index
    %0 = vector.load %arg4[%c0, %c0_0] : memref<129x1xf32, #tpu.memory_space<vmem>>, vector<16x1xf32>
    %c16 = arith.constant 16 : index
    %c0_1 = arith.constant 0 : index
    %1 = vector.load %arg4[%c16, %c0_1] : memref<129x1xf32, #tpu.memory_space<vmem>>, vector<48x1xf32>
    %c64 = arith.constant 64 : index
    %c0_2 = arith.constant 0 : index
    %2 = vector.load %arg4[%c64, %c0_2] : memref<129x1xf32, #tpu.memory_space<vmem>>, vector<48x1xf32>
    %c112 = arith.constant 112 : index
    %c0_3 = arith.constant 0 : index
    %3 = vector.load %arg4[%c112, %c0_3] : memref<129x1xf32, #tpu.memory_space<vmem>>, vector<16x1xf32>
    %c128 = arith.constant 128 : index
    %c0_4 = arith.constant 0 : index
    %4 = vector.load %arg4[%c128, %c0_4] : memref<129x1xf32, #tpu.memory_space<vmem>>, vector<1x1xf32>
    %c0_5 = arith.constant 0 : index
    %c0_6 = arith.constant 0 : index
    %5 = vector.load %arg1[%c0_5, %c0_6] : memref<256x64xf32, #tpu.memory_space<vmem>>, vector<256x64xf32>
    %6 = tpu.transpose %5, [1, 0] : vector<256x64xf32> -> vector<64x256xf32>
    %7 = arith.truncf %6 : vector<64x256xf32> to vector<64x256xbf16>
    %c0_7 = arith.constant 0 : index
    %c0_8 = arith.constant 0 : index
    %8 = vector.load %arg2[%c0_7, %c0_8] : memref<16x64xbf16, #tpu.memory_space<vmem>>, vector<16x64xbf16>
    %cst = arith.constant dense<0.000000e+00> : vector<16x256xf32>
    %9 = tpu.matmul %8, %7, %cst {dimension_numbers = #tpu.dot_dimension_numbers<[1], [0], [0], [1], [0, 0, 1, 1], [], []>} : vector<16x64xbf16>, vector<64x256xbf16>, vector<16x256xf32> -> vector<16x256xf32>
    %10 = vector.broadcast %0 : vector<16x1xf32> to vector<16x256xf32>
    %11 = arith.addf %9, %10 : vector<16x256xf32>
    %cst_9 = arith.constant 0.000000e+00 : f32
    %12 = vector.broadcast %cst_9 : f32 to vector<16x256xf32>
    %13 = arith.maximumf %11, %12 : vector<16x256xf32>
    %c0_10 = arith.constant 0 : index
    %c0_11 = arith.constant 0 : index
    %14 = vector.load %arg3[%c0_10, %c0_11] : memref<96x16xbf16, #tpu.memory_space<vmem>>, vector<48x16xbf16>
    %15 = arith.truncf %13 : vector<16x256xf32> to vector<16x256xbf16>
    %cst_12 = arith.constant dense<0.000000e+00> : vector<48x256xf32>
    %16 = tpu.matmul %14, %15, %cst_12 {dimension_numbers = #tpu.dot_dimension_numbers<[1], [0], [0], [1], [0, 0, 1, 1], [], []>} : vector<48x16xbf16>, vector<16x256xbf16>, vector<48x256xf32> -> vector<48x256xf32>
    %17 = vector.broadcast %1 : vector<48x1xf32> to vector<48x256xf32>
    %18 = arith.addf %16, %17 : vector<48x256xf32>
    %19 = vector.extract_strided_slice %18 {offsets = [0, 0], sizes = [16, 256], strides = [1, 1]} : vector<48x256xf32> to vector<16x256xf32>
    %cst_13 = arith.constant 5.000000e-01 : f32
    %20 = vector.broadcast %cst_13 : f32 to vector<16x256xf32>
    %21 = arith.mulf %20, %19 : vector<16x256xf32>
    %22 = math.tanh %21 : vector<16x256xf32>
    %cst_14 = arith.constant 5.000000e-01 : f32
    %23 = vector.broadcast %cst_14 : f32 to vector<16x256xf32>
    %24 = arith.mulf %23, %22 : vector<16x256xf32>
    %cst_15 = arith.constant 5.000000e-01 : f32
    %25 = vector.broadcast %cst_15 : f32 to vector<16x256xf32>
    %26 = arith.addf %24, %25 : vector<16x256xf32>
    %27 = vector.extract_strided_slice %18 {offsets = [16, 0], sizes = [16, 256], strides = [1, 1]} : vector<48x256xf32> to vector<16x256xf32>
    %28 = math.tanh %27 : vector<16x256xf32>
    %29 = vector.extract_strided_slice %18 {offsets = [32, 0], sizes = [16, 256], strides = [1, 1]} : vector<48x256xf32> to vector<16x256xf32>
    %cst_16 = arith.constant 5.000000e-01 : f32
    %30 = vector.broadcast %cst_16 : f32 to vector<16x256xf32>
    %31 = arith.mulf %30, %29 : vector<16x256xf32>
    %32 = math.tanh %31 : vector<16x256xf32>
    %cst_17 = arith.constant 5.000000e-01 : f32
    %33 = vector.broadcast %cst_17 : f32 to vector<16x256xf32>
    %34 = arith.mulf %33, %32 : vector<16x256xf32>
    %cst_18 = arith.constant 5.000000e-01 : f32
    %35 = vector.broadcast %cst_18 : f32 to vector<16x256xf32>
    %36 = arith.addf %34, %35 : vector<16x256xf32>
    %37 = arith.mulf %26, %28 : vector<16x256xf32>
    %38 = math.tanh %37 : vector<16x256xf32>
    %39 = arith.mulf %36, %38 : vector<16x256xf32>
    %c48 = arith.constant 48 : index
    %c0_19 = arith.constant 0 : index
    %40 = vector.load %arg3[%c48, %c0_19] : memref<96x16xbf16, #tpu.memory_space<vmem>>, vector<48x16xbf16>
    %41 = arith.truncf %39 : vector<16x256xf32> to vector<16x256xbf16>
    %cst_20 = arith.constant dense<0.000000e+00> : vector<48x256xf32>
    %42 = tpu.matmul %40, %41, %cst_20 {dimension_numbers = #tpu.dot_dimension_numbers<[1], [0], [0], [1], [0, 0, 1, 1], [], []>} : vector<48x16xbf16>, vector<16x256xbf16>, vector<48x256xf32> -> vector<48x256xf32>
    %43 = vector.broadcast %2 : vector<48x1xf32> to vector<48x256xf32>
    %44 = arith.addf %42, %43 : vector<48x256xf32>
    %45 = vector.extract_strided_slice %44 {offsets = [0, 0], sizes = [16, 256], strides = [1, 1]} : vector<48x256xf32> to vector<16x256xf32>
    %cst_21 = arith.constant 5.000000e-01 : f32
    %46 = vector.broadcast %cst_21 : f32 to vector<16x256xf32>
    %47 = arith.mulf %46, %45 : vector<16x256xf32>
    %48 = math.tanh %47 : vector<16x256xf32>
    %cst_22 = arith.constant 5.000000e-01 : f32
    %49 = vector.broadcast %cst_22 : f32 to vector<16x256xf32>
    %50 = arith.mulf %49, %48 : vector<16x256xf32>
    %cst_23 = arith.constant 5.000000e-01 : f32
    %51 = vector.broadcast %cst_23 : f32 to vector<16x256xf32>
    %52 = arith.addf %50, %51 : vector<16x256xf32>
    %53 = vector.extract_strided_slice %44 {offsets = [16, 0], sizes = [16, 256], strides = [1, 1]} : vector<48x256xf32> to vector<16x256xf32>
    %54 = math.tanh %53 : vector<16x256xf32>
    %55 = vector.extract_strided_slice %44 {offsets = [32, 0], sizes = [16, 256], strides = [1, 1]} : vector<48x256xf32> to vector<16x256xf32>
    %cst_24 = arith.constant 5.000000e-01 : f32
    %56 = vector.broadcast %cst_24 : f32 to vector<16x256xf32>
    %57 = arith.mulf %56, %55 : vector<16x256xf32>
    %58 = math.tanh %57 : vector<16x256xf32>
    %cst_25 = arith.constant 5.000000e-01 : f32
    %59 = vector.broadcast %cst_25 : f32 to vector<16x256xf32>
    %60 = arith.mulf %59, %58 : vector<16x256xf32>
    %cst_26 = arith.constant 5.000000e-01 : f32
    %61 = vector.broadcast %cst_26 : f32 to vector<16x256xf32>
    %62 = arith.addf %60, %61 : vector<16x256xf32>
    %63 = arith.mulf %52, %54 : vector<16x256xf32>
    %64 = math.tanh %63 : vector<16x256xf32>
    %65 = arith.mulf %62, %64 : vector<16x256xf32>
    %66 = vector.broadcast %3 : vector<16x1xf32> to vector<16x256xf32>
    %67 = arith.mulf %66, %65 : vector<16x256xf32>
    %cst_27 = arith.constant dense<0.000000e+00> : vector<256xf32>
    %68 = vector.multi_reduction <add>, %67, %cst_27 [0] : vector<16x256xf32> to vector<256xf32>
    %69 = vector.shape_cast %68 : vector<256xf32> to vector<1x256xf32>
    %70 = vector.broadcast %4 : vector<1x1xf32> to vector<1x256xf32>
    %71 = arith.addf %69, %70 : vector<1x256xf32>
    %72 = math.tanh %71 : vector<1x256xf32>
    %c0_28 = arith.constant 0 : index
    %c0_29 = arith.constant 0 : index
    %73 = vector.load %arg5[%c0_28, %c0_29] : memref<1x256xf32, #tpu.memory_space<vmem>>, vector<1x256xf32>
    tpu.vector_store %arg5[%c0_28, %c0_29], %72 {strides = array<i32>} : memref<1x256xf32, #tpu.memory_space<vmem>>, vector<1x256xf32>,
    return
  }
  func.func @transform_0(%arg0: i32) -> (i32, i32) {
    %c0_i32 = arith.constant 0 : i32
    %c0_i32_0 = arith.constant 0 : i32
    return %arg0, %c0_i32 : i32, i32
  }
  func.func @transform_1(%arg0: i32) -> (i32, i32) {
    %c0_i32 = arith.constant 0 : i32
    %c0_i32_0 = arith.constant 0 : i32
    %c0_i32_1 = arith.constant 0 : i32
    return %c0_i32, %c0_i32_0 : i32, i32
  }
  func.func @transform_2(%arg0: i32) -> (i32, i32) {
    %c0_i32 = arith.constant 0 : i32
    %c0_i32_0 = arith.constant 0 : i32
    %c0_i32_1 = arith.constant 0 : i32
    return %c0_i32, %c0_i32_0 : i32, i32
  }
  func.func @transform_3(%arg0: i32) -> (i32, i32) {
    %c0_i32 = arith.constant 0 : i32
    %c0_i32_0 = arith.constant 0 : i32
    %c0_i32_1 = arith.constant 0 : i32
    return %c0_i32, %c0_i32_0 : i32, i32
  }
  func.func @transform_4(%arg0: i32) -> (i32, i32) {
    %c0_i32 = arith.constant 0 : i32
    %c0_i32_0 = arith.constant 0 : i32
    return %c0_i32, %arg0 : i32, i32
  }
}

</mosaic_0001>

<llo_original>
// kernel: tpu_custom_call.1
$region0: #{tpu_custom_call.1}
  #allocation0 [shape = 'u32[]', space=smem, size = 0x4, offset = 0x4, fixed_abs, tag = 'smem constant byte address 0x4 - core index']
  #allocation1 [shape = 'u32[144,128]{1,0:T(1,128)}', space=vmem, size = 0x12000, scoped, tag = 'internal scratch']
  %s0 = inlined_call_operand.vmem [shape: f32[300,64], index: 0, kind: input, shape index: {}]
  %s1 = inlined_call_operand.vmem [shape: bf16[16,64], index: 1, kind: input, shape index: {}]
  %s2 = inlined_call_operand.vmem [shape: bf16[96,16], index: 2, kind: input, shape index: {}]
  %s3 = inlined_call_operand.vmem [shape: f32[129,1], index: 3, kind: input, shape index: {}]
  %s4 = inlined_call_operand.hbm [shape: f32[1,300], index: 4, kind: output, shape index: {}]
  %s5 = sld [smem:[#allocation0]]
  $region49: #{tpu_custom_call.1} parent=0
    _
  %s7 = ssub.s32 1, %s5
  %s8 = scalar_select 0, %s7, %s5
  $region1: #{tpu_custom_call.1} parent=0
    #allocation2 [shape = 'u8[2048]{0}', space=vmem, size = 0x800, scoped, tag = 'output window, operand 0']
    #allocation3 [shape = 's32[2]{0}', space=sflag, size = 0x8, scoped, tag = 'scoped memory for tpu_custom_call.1']
    %9 = vsyncpa [#allocation3], 0
    %s10 = scalar_lea.sflag [#allocation3], 1
    %11 = vsyncpa %s10, 0
    loop: start=0, step=1, limit=4
    $region2: #{tpu_custom_call.1} parent=1 // loop_pre_header
      _
    $region3: #{tpu_custom_call.1} parent=1 // loop_header
      %s13 = sphi 0, %s17
      %p14 = scmp.ge.s32.totalorder %s13, 4
      %s23 = sphi 0, %s25
      %s26 = sphi 0, %s23
      %s27 = sphi 0, %s26
      %s43 = sphi 0, %s27
      %s47 = sphi 0, %s47
      %s49 = sphi 0, %s47
      %s50 = sphi 0, %s49
      %s64 = sphi 0, %s50
      %s68 = sphi 0, %s68
      %s70 = sphi 0, %s68
      %s71 = sphi 0, %s70
      %s85 = sphi 0, %s71
      %s89 = sphi 0, %s89
      %s91 = sphi 0, %s89
      %s92 = sphi 0, %s91
      %s106 = sphi 0, %s92
      %s112 = sphi 0, %s114
      %s115 = sphi 0, %s112
      %s116 = sphi 0, %s115
      %s132 = sphi 0, %s116
    $region4: #{tpu_custom_call.1} parent=1 // loop_header_branch
      %16 = sbr.rel (%p14) target = $region8
    $region5: #{tpu_custom_call.1} parent=1 // loop_body
      %s18 = ssub.s32 %s13, 1
      %s19 = ssub.s32 %s13, 2
      %s20 = sadd.s32 %s13, 1
      %s21 = ssub.s32 %s13, %s20
      %p22 = scmp.eq.s32.totalorder %s21, 0
      %s24 = sadd.s32 %s23, 1
      %s25 = scalar_select %p22, %s23, %s24
      %p28 = pneg %p22
      %p29 = scmp.eq.s32.totalorder %s13, 1
      %p30 = por %p28, %p29
      %p31 = scmp.ne.s32.totalorder %s23, %s26
      %p32 = scmp.eq.s32.totalorder %s13, 0
      %p33 = por %p31, %p32
      %p34 = scmp.ne.s32.totalorder %s23, %s26
      %p35 = scmp.eq.s32.totalorder %s18, 1
      %p36 = por %p34, %p35
      %p37 = scmp.ne.s32.totalorder %s26, %s27
      %p38 = scmp.eq.s32.totalorder %s18, 0
      %p39 = por %p37, %p38
      %p40 = scmp.ne.s32.totalorder %s26, %s27
      %p41 = scmp.eq.s32.totalorder %s19, 1
      %p42 = por %p40, %p41
      %p44 = scmp.ne.s32.totalorder %s27, %s43
      %p45 = scmp.eq.s32.totalorder %s19, 0
      %p46 = por %p44, %p45
      %s48 = sadd.s32 %s47, 1
      %p51 = scmp.eq.s32.totalorder %s13, 1
      %p52 = scmp.ne.s32.totalorder %s47, %s49
      %p53 = scmp.eq.s32.totalorder %s13, 0
      %p54 = por %p52, %p53
      %p55 = scmp.ne.s32.totalorder %s47, %s49
      %p56 = scmp.eq.s32.totalorder %s18, 1
      %p57 = por %p55, %p56
      %p58 = scmp.ne.s32.totalorder %s49, %s50
      %p59 = scmp.eq.s32.totalorder %s18, 0
      %p60 = por %p58, %p59
      %p61 = scmp.ne.s32.totalorder %s49, %s50
      %p62 = scmp.eq.s32.totalorder %s19, 1
      %p63 = por %p61, %p62
      %p65 = scmp.ne.s32.totalorder %s50, %s64
      %p66 = scmp.eq.s32.totalorder %s19, 0
      %p67 = por %p65, %p66
      %s69 = sadd.s32 %s68, 1
      %p72 = scmp.eq.s32.totalorder %s13, 1
      %p73 = scmp.ne.s32.totalorder %s68, %s70
      %p74 = scmp.eq.s32.totalorder %s13, 0
      %p75 = por %p73, %p74
      %p76 = scmp.ne.s32.totalorder %s68, %s70
      %p77 = scmp.eq.s32.totalorder %s18, 1
      %p78 = por %p76, %p77
      %p79 = scmp.ne.s32.totalorder %s70, %s71
      %p80 = scmp.eq.s32.totalorder %s18, 0
      %p81 = por %p79, %p80
      %p82 = scmp.ne.s32.totalorder %s70, %s71
      %p83 = scmp.eq.s32.totalorder %s19, 1
      %p84 = por %p82, %p83
      %p86 = scmp.ne.s32.totalorder %s71, %s85
      %p87 = scmp.eq.s32.totalorder %s19, 0
      %p88 = por %p86, %p87
      %s90 = sadd.s32 %s89, 1
      %p93 = scmp.eq.s32.totalorder %s13, 1
      %p94 = scmp.ne.s32.totalorder %s89, %s91
      %p95 = scmp.eq.s32.totalorder %s13, 0
      %p96 = por %p94, %p95
      %p97 = scmp.ne.s32.totalorder %s89, %s91
      %p98 = scmp.eq.s32.totalorder %s18, 1
      %p99 = por %p97, %p98
      %p100 = scmp.ne.s32.totalorder %s91, %s92
      %p101 = scmp.eq.s32.totalorder %s18, 0
      %p102 = por %p100, %p101
      %p103 = scmp.ne.s32.totalorder %s91, %s92
      %p104 = scmp.eq.s32.totalorder %s19, 1
      %p105 = por %p103, %p104
      %p107 = scmp.ne.s32.totalorder %s92, %s106
      %p108 = scmp.eq.s32.totalorder %s19, 0
      %p109 = por %p107, %p108
      %s110 = ssub.s32 %s13, %s20
      %p111 = scmp.eq.s32.totalorder %s110, 0
      %s113 = sadd.s32 %s112, 1
      %s114 = scalar_select %p111, %s112, %s113
      %p117 = pneg %p111
      %p118 = scmp.eq.s32.totalorder %s13, 1
      %p119 = por %p117, %p118
      %p120 = scmp.ne.s32.totalorder %s112, %s115
      %p121 = scmp.eq.s32.totalorder %s13, 0
      %p122 = por %p120, %p121
      %p123 = scmp.ne.s32.totalorder %s112, %s115
      %p124 = scmp.eq.s32.totalorder %s18, 1
      %p125 = por %p123, %p124
      %p126 = scmp.ne.s32.totalorder %s115, %s116
      %p127 = scmp.eq.s32.totalorder %s18, 0
      %p128 = por %p126, %p127
      %p129 = scmp.ne.s32.totalorder %s115, %s116
      %p130 = scmp.eq.s32.totalorder %s19, 1
      %p131 = por %p129, %p130
      %p133 = scmp.ne.s32.totalorder %s116, %s132
      %p134 = scmp.eq.s32.totalorder %s19, 0
      %p135 = por %p133, %p134
      %p136 = scmp.le.s32.totalorder 1, %s13
      %p137 = scmp.lt.s32.totalorder %s13, 3
      %p138 = pnand %p136, %p137
      %p139 = pneg %p138
      // Predicated region
      $region9: #{tpu_custom_call.1} parent=5 // pred_check
        _
      $region10: #{tpu_custom_call.1} parent=5 // pred_check_branch
        %141 = sbr.rel (%p138) target = $region12
      $region11: #{tpu_custom_call.1} parent=5 // pred_region
        %s142 = ssub.s32 %s13, 1
        // Predicated region
        $region13: #{tpu_custom_call.1} parent=11 // pred_check
          %p143 = pneg %p60
        $region14: #{tpu_custom_call.1} parent=11 // pred_check_branch
          %145 = sbr.rel (%p143) target = $region16
        $region15: #{tpu_custom_call.1} parent=11 // pred_region
          _
        $region16: #{tpu_custom_call.1} parent=11 // pred_fallthru
          _
        // Predicated region
        $region17: #{tpu_custom_call.1} parent=11 // pred_check
          %p146 = pneg %p81
        $region18: #{tpu_custom_call.1} parent=11 // pred_check_branch
          %148 = sbr.rel (%p146) target = $region20
        $region19: #{tpu_custom_call.1} parent=11 // pred_region
          _
        $region20: #{tpu_custom_call.1} parent=11 // pred_fallthru
          _
        // Predicated region
        $region21: #{tpu_custom_call.1} parent=11 // pred_check
          %p149 = pneg %p102
        $region22: #{tpu_custom_call.1} parent=11 // pred_check_branch
          %151 = sbr.rel (%p149) target = $region24
        $region23: #{tpu_custom_call.1} parent=11 // pred_region
          _
        $region24: #{tpu_custom_call.1} parent=11 // pred_fallthru
          _
      $region12: #{tpu_custom_call.1} parent=5 // pred_fallthru
        _
      %p152 = scmp.lt.s32.totalorder %s13, 2
      // Predicated region
      $region25: #{tpu_custom_call.1} parent=5 // pred_check
        %p153 = pneg %p152
      $region26: #{tpu_custom_call.1} parent=5 // pred_check_branch
        %155 = sbr.rel (%p153) target = $region28
      $region27: #{tpu_custom_call.1} parent=5 // pred_region
        // Predicated region
        $region29: #{tpu_custom_call.1} parent=27 // pred_check
          %p156 = pneg %p33
        $region30: #{tpu_custom_call.1} parent=27 // pred_check_branch
          %158 = sbr.rel (%p156) target = $region32
        $region31: #{tpu_custom_call.1} parent=27 // pred_region
          %s159 = smul.u32 32, %s13
          %s160 = ssub.s32 38, %s159
          %p161 = scmp.lt.s32.totalorder %s160, 32
          %s162 = scalar_select %p161, %s160, 32
          %s163 = smul.u32 128, %s162
          %p164 = scmp.lt.s32.totalorder %s159, 37
          %s165 = scalar_select %p164, %s159, 37
          %s166 = smul.addr %s165, 8
          %s167 = scalar_lea.vmem %s0, %s166
          %s168 = smul.u32 32, %s13
          %s169 = ssub.s32 38, %s168
          %p170 = scmp.lt.s32.totalorder %s169, 32
          %s171 = scalar_select %p170, %s169, 32
          %s172 = smul.u32 128, %s171
        $region32: #{tpu_custom_call.1} parent=27 // pred_fallthru
          _
      $region28: #{tpu_custom_call.1} parent=5 // pred_fallthru
        _
      %p173 = scmp.le.s32.totalorder 1, %s13
      %p174 = scmp.lt.s32.totalorder %s13, 3
      %p175 = pnand %p173, %p174
      %p176 = pneg %p175
      // Predicated region
      $region33: #{tpu_custom_call.1} parent=5 // pred_check
        _
      $region34: #{tpu_custom_call.1} parent=5 // pred_check_branch
        %178 = sbr.rel (%p175) target = $region36
      $region35: #{tpu_custom_call.1} parent=5 // pred_region
        %s179 = ssub.s32 %s13, 1
        %s180 = smul.u32 32, %s18
        %s181 = ssub.s32 38, %s180
        %p182 = scmp.lt.s32.totalorder %s181, 32
        %s183 = scalar_select %p182, %s181, 32
        %s184 = smul.u32 128, %s183
        %p185 = scmp.lt.s32.totalorder %s180, 37
        %s186 = scalar_select %p185, %s180, 37
        %s187 = smul.addr %s186, 8
        %s188 = scalar_lea.vmem %s0, %s187
        %p189 = pneg %p39
        %p190 = pneg %p36
        %p191 = pneg %p60
        %p192 = pneg %p57
        %p193 = pneg %p81
        %p194 = pneg %p78
        %p195 = pneg %p102
        %p196 = pneg %p99
        %p197 = pneg %p128
        %p198 = pneg %p125
        %s199 = sand.u32 %s115, 1
        %s200 = scalar_lea.sflag [#allocation3], %s199
        %s201 = sand.u32 %s115, 1
        %s202 = smul.addr %s201, 2
        %s203 = scalar_lea.vmem [#allocation2], %s202
        %s204 = smul.u32 32, %s18
        %s205 = ssub.s32 38, %s204
        %p206 = scmp.lt.s32.totalorder %s205, 32
        %s207 = scalar_select %p206, %s205, 32
        %s208 = smul.u32 128, %s207
        %p209 = scmp.lt.s32.totalorder %s204, 37
        %s210 = scalar_select %p209, %s204, 37
        %s211 = smul.addr %s210, 8
        %s212 = scalar_lea.vmem %s0, %s211
        %s213 = smul.u32 32, %s18
        %s214 = ssub.s32 38, %s213
        %p215 = scmp.lt.s32.totalorder %s214, 32
        %s216 = scalar_select %p215, %s214, 32
        %s217 = smul.u32 128, %s216
        %s218 = smul.u32 2, %s18
        %s219 = ssub.s32 3, %s218
        %p220 = scmp.lt.s32.totalorder %s219, 2
        %s221 = scalar_select %p220, %s219, 2
        %s222 = smul.u32 16, %s221
        %v224 = vld [vmem:[%s3] sm:$0xff]
        %v225 = vld [vmem:[%s3 + $0x8] sm:$0xff]
        %v226 = vld [vmem:[%s3 + $0x10] sm:$0xff]
        %v227 = vld [vmem:[%s3 + $0x18] sm:$0xff]
        %v228 = vld [vmem:[%s3 + $0x20] sm:$0xff]
        %v229 = vld [vmem:[%s3 + $0x28] sm:$0xff]
        %v230 = vld [vmem:[%s3 + $0x30] sm:$0xff]
        %v231 = vld [vmem:[%s3 + $0x38] sm:$0xff]
        %v232 = vld [vmem:[%s3 + $0x40] sm:$0xff]
        %v233 = vld [vmem:[%s3 + $0x48] sm:$0xff]
        %v234 = vld [vmem:[%s3 + $0x50] sm:$0xff]
        %v235 = vld [vmem:[%s3 + $0x58] sm:$0xff]
        %v236 = vld [vmem:[%s3 + $0x60] sm:$0xff]
        %v237 = vld [vmem:[%s3 + $0x68] sm:$0xff]
        %v238 = vld [vmem:[%s3 + $0x70] sm:$0xff]
        %v239 = vld [vmem:[%s3 + $0x78] sm:$0xff]
        %v240 = vld [vmem:[%s3 + $0x80] sm:$0x1]
        %v241 = vld [vmem:[%s212] sm:$0xff]
        %v242 = vld [vmem:[%s212 + $0x8] sm:$0xff]
        %v243 = vld [vmem:[%s212 + $0x10] sm:$0xff]
        %v244 = vld [vmem:[%s212 + $0x18] sm:$0xff]
        %v245 = vld [vmem:[%s212 + $0x20] sm:$0xff]
        %v246 = vld [vmem:[%s212 + $0x28] sm:$0xff]
        %v247 = vld [vmem:[%s212 + $0x30] sm:$0xff]
        %v248 = vld [vmem:[%s212 + $0x38] sm:$0xff]
        %v249 = vld [vmem:[%s212 + $0x40] sm:$0xff]
        %v250 = vld [vmem:[%s212 + $0x48] sm:$0xff]
        %v251 = vld [vmem:[%s212 + $0x50] sm:$0xff]
        %v252 = vld [vmem:[%s212 + $0x58] sm:$0xff]
        %v253 = vld [vmem:[%s212 + $0x60] sm:$0xff]
        %v254 = vld [vmem:[%s212 + $0x68] sm:$0xff]
        %v255 = vld [vmem:[%s212 + $0x70] sm:$0xff]
        %v256 = vld [vmem:[%s212 + $0x78] sm:$0xff]
        %v257 = vld [vmem:[%s212 + $0x80] sm:$0xff]
        %v258 = vld [vmem:[%s212 + $0x88] sm:$0xff]
        %v259 = vld [vmem:[%s212 + $0x90] sm:$0xff]
        %v260 = vld [vmem:[%s212 + $0x98] sm:$0xff]
        %v261 = vld [vmem:[%s212 + $0xa0] sm:$0xff]
        %v262 = vld [vmem:[%s212 + $0xa8] sm:$0xff]
        %v263 = vld [vmem:[%s212 + $0xb0] sm:$0xff]
        %v264 = vld [vmem:[%s212 + $0xb8] sm:$0xff]
        %v265 = vld [vmem:[%s212 + $0xc0] sm:$0xff]
        %v266 = vld [vmem:[%s212 + $0xc8] sm:$0xff]
        %v267 = vld [vmem:[%s212 + $0xd0] sm:$0xff]
        %v268 = vld [vmem:[%s212 + $0xd8] sm:$0xff]
        %v269 = vld [vmem:[%s212 + $0xe0] sm:$0xff]
        %v270 = vld [vmem:[%s212 + $0xe8] sm:$0xff]
        %v271 = vld [vmem:[%s212 + $0xf0] sm:$0xff]
        %v272 = vld [vmem:[%s212 + $0xf8] sm:$0xff]
        %273 = vxpose.xlu0.b32.start [1/16] %v241, 128
        %274 = vxpose.xlu0.b32.cont [2/16] %v242, 128
        %275 = vxpose.xlu0.b32.cont [3/16] %v243, 128
        %276 = vxpose.xlu0.b32.cont [4/16] %v244, 128
        %277 = vxpose.xlu0.b32.cont [5/16] %v245, 128
        %278 = vxpose.xlu0.b32.cont [6/16] %v246, 128
        %279 = vxpose.xlu0.b32.cont [7/16] %v247, 128
        %280 = vxpose.xlu0.b32.cont [8/16] %v248, 128
        %281 = vxpose.xlu0.b32.cont [9/16] %v249, 128
        %282 = vxpose.xlu0.b32.cont [10/16] %v250, 128
        %283 = vxpose.xlu0.b32.cont [11/16] %v251, 128
        %284 = vxpose.xlu0.b32.cont [12/16] %v252, 128
        %285 = vxpose.xlu0.b32.cont [13/16] %v253, 128
        %286 = vxpose.xlu0.b32.cont [14/16] %v254, 128
        %287 = vxpose.xlu0.b32.cont [15/16] %v255, 128
        %288 = vxpose.xlu0.b32.end [16/16] %v256, 128
        %v289 = vpop.trf.xlu0
        %v290 = vpop.trf.xlu0
        %v291 = vpop.trf.xlu0
        %v292 = vpop.trf.xlu0
        %v293 = vpop.trf.xlu0
        %v294 = vpop.trf.xlu0
        %v295 = vpop.trf.xlu0
        %v296 = vpop.trf.xlu0
        %v297 = vpop.trf.xlu0
        %v298 = vpop.trf.xlu0
        %v299 = vpop.trf.xlu0
        %v300 = vpop.trf.xlu0
        %v301 = vpop.trf.xlu0
        %v302 = vpop.trf.xlu0
        %v303 = vpop.trf.xlu0
        %v304 = vpop.trf.xlu0
        %305 = vxpose.xlu0.b32.start [1/16] %v257, 128
        %306 = vxpose.xlu0.b32.cont [2/16] %v258, 128
        %307 = vxpose.xlu0.b32.cont [3/16] %v259, 128
        %308 = vxpose.xlu0.b32.cont [4/16] %v260, 128
        %309 = vxpose.xlu0.b32.cont [5/16] %v261, 128
        %310 = vxpose.xlu0.b32.cont [6/16] %v262, 128
        %311 = vxpose.xlu0.b32.cont [7/16] %v263, 128
        %312 = vxpose.xlu0.b32.cont [8/16] %v264, 128
        %313 = vxpose.xlu0.b32.cont [9/16] %v265, 128
        %314 = vxpose.xlu0.b32.cont [10/16] %v266, 128
        %315 = vxpose.xlu0.b32.cont [11/16] %v267, 128
        %316 = vxpose.xlu0.b32.cont [12/16] %v268, 128
        %317 = vxpose.xlu0.b32.cont [13/16] %v269, 128
        %318 = vxpose.xlu0.b32.cont [14/16] %v270, 128
        %319 = vxpose.xlu0.b32.cont [15/16] %v271, 128
        %320 = vxpose.xlu0.b32.end [16/16] %v272, 128
        %v321 = vpop.trf.xlu0
        %v322 = vpop.trf.xlu0
        %v323 = vpop.trf.xlu0
        %v324 = vpop.trf.xlu0
        %v325 = vpop.trf.xlu0
        %v326 = vpop.trf.xlu0
        %v327 = vpop.trf.xlu0
        %v328 = vpop.trf.xlu0
        %v329 = vpop.trf.xlu0
        %v330 = vpop.trf.xlu0
        %v331 = vpop.trf.xlu0
        %v332 = vpop.trf.xlu0
        %v333 = vpop.trf.xlu0
        %v334 = vpop.trf.xlu0
        %v335 = vpop.trf.xlu0
        %v336 = vpop.trf.xlu0
        %v337 = vpack.c.bf16 %v290, %v289
        %v338 = vpack.c.bf16 %v322, %v321
        %v339 = vpack.c.bf16 %v292, %v291
        %v340 = vpack.c.bf16 %v324, %v323
        %v341 = vpack.c.bf16 %v294, %v293
        %v342 = vpack.c.bf16 %v326, %v325
        %v343 = vpack.c.bf16 %v296, %v295
        %v344 = vpack.c.bf16 %v328, %v327
        %v345 = vld [vmem:[%s1] sm:$0xf]
        %v346 = vld [vmem:[%s1 + $0x4] sm:$0xf]
        %348 = vset.pattern.permute.xlu0 0
        %349 = vperm.xlu0 %348, %v224
        %v350 = vpop.permute.xlu0 %349
        %353 = vset.pattern.permute.xlu0 0
        %354 = vperm.xlu0 %353, %v225
        %v355 = vpop.permute.xlu0 %354
        %v359 = vunpack.c.l.b16 %v345
        %v360 = vunpack.c.l.b16 %v346
        %v361 = vpack.c.b16 %v360, %v359
        %vm362 = vcmask 523264
        %v364 = vsel %vm362, %v361, 0
        %366 = vmatprep.subr.bf16.mxu0 0
        %367 = vmatpush1.bf16.msra.mxu0 0
        %368 = vmatprep.subr.bf16.mxu0 0
        %369 = vmatpush1.bf16.msra.mxu0 0
        %370 = vmatprep.subr.bf16.mxu0 0
        %371 = vmatpush1.bf16.msra.mxu0 0
        %372 = vmatprep.subr.bf16.mxu0 0
        %373 = vmatpush1.bf16.msra.mxu0 0
        %374 = vmatprep.subr.bf16.mxu0 %v344
        %375 = vmatpush1.bf16.msra.mxu0 %v343
        %376 = vmatprep.subr.bf16.mxu0 %v342
        %377 = vmatpush1.bf16.msra.mxu0 %v341
        %378 = vmatprep.subr.bf16.mxu0 %v340
        %379 = vmatpush1.bf16.msra.mxu0 %v339
        %380 = vmatprep.subr.bf16.mxu0 %v338
        %381 = vmatpush1.bf16.msra.mxu0 %v337
        %382 = vmatprep.subr.bf16.mxu0 0
        %383 = vmatpush2.bf16.msra.mxu0 0
        %384 = vmatprep.subr.bf16.mxu0 0
        %385 = vmatpush2.bf16.msra.mxu0 0
        %386 = vmatprep.subr.bf16.mxu0 0
        %387 = vmatpush2.bf16.msra.mxu0 0
        %388 = vmatprep.subr.bf16.mxu0 0
        %389 = vmatpush2.bf16.msra.mxu0 0
        %390 = vmatprep.subr.bf16.mxu0 0
        %391 = vmatpush2.bf16.msra.mxu0 0
        %392 = vmatprep.subr.bf16.mxu0 0
        %393 = vmatpush2.bf16.msra.mxu0 0
        %394 = vmatprep.subr.bf16.mxu0 0
        %395 = vmatpush2.bf16.msra.mxu0 0
        %396 = vmatprep.subr.bf16.mxu0 0
        %397 = vmatpush2.bf16.msra.mxu0 0
        %398 = vmatprep.mubr.bf16.mxu0 0
        %399 = vmatmul.mubr.bf16.gmra.mxu0 %v364
        %v400 = vpop.f32.mrf.mxu0
        %v401 = vadd.f32 %v350, %v400
        %v402 = vpop.f32.mrf.mxu0
        %v403 = vadd.f32 %v350, %v402
        %v404 = vpop.f32.mrf.mxu0
        %v405 = vadd.f32 %v355, %v404
        %v406 = vpop.f32.mrf.mxu0
        %v407 = vadd.f32 %v355, %v406
        %408 = vdwg.mxu0
        %v409 = vmax.f32 %v401, 0.0
        %v410 = vmax.f32 %v403, 0.0
        %v411 = vmax.f32 %v405, 0.0
        %v412 = vmax.f32 %v407, 0.0
        %v413 = vld [vmem:[%s2] sm:$0xf]
        %v414 = vld [vmem:[%s2 + $0x4] sm:$0xf]
        %v415 = vld [vmem:[%s2 + $0x8] sm:$0xf]
        %v416 = vld [vmem:[%s2 + $0xc] sm:$0xf]
        %v417 = vld [vmem:[%s2 + $0x10] sm:$0xf]
        %v418 = vld [vmem:[%s2 + $0x14] sm:$0xf]
        %v419 = vpack.c.bf16 %v411, %v409
        %v420 = vpack.c.bf16 %v412, %v410
        %422 = vset.pattern.permute.xlu0 0
        %423 = vperm.xlu0 %422, %v226
        %v424 = vpop.permute.xlu0 %423
        %427 = vset.pattern.permute.xlu0 0
        %428 = vperm.xlu0 %427, %v227
        %v429 = vpop.permute.xlu0 %428
        %432 = vset.pattern.permute.xlu0 0
        %433 = vperm.xlu0 %432, %v228
        %v434 = vpop.permute.xlu0 %433
        %437 = vset.pattern.permute.xlu0 0
        %438 = vperm.xlu0 %437, %v229
        %v439 = vpop.permute.xlu0 %438
        %442 = vset.pattern.permute.xlu0 0
        %443 = vperm.xlu0 %442, %v230
        %v444 = vpop.permute.xlu0 %443
        %447 = vset.pattern.permute.xlu0 0
        %448 = vperm.xlu0 %447, %v231
        %v449 = vpop.permute.xlu0 %448
        %v457 = vunpack.c.l.b16 %v413
        %v458 = vunpack.c.l.b16 %v414
        %v459 = vunpack.c.l.b16 %v415
        %v460 = vunpack.c.l.b16 %v416
        %v461 = vunpack.c.l.b16 %v417
        %v462 = vunpack.c.l.b16 %v418
        %v463 = vpack.c.b16 %v458, %v457
        %v464 = vpack.c.b16 %v460, %v459
        %v465 = vpack.c.b16 %v462, %v461
        %vm466 = vcmask 130048
        %v468 = vsel %vm466, %v463, 0
        %v471 = vsel %vm466, %v464, 0
        %v474 = vsel %vm466, %v465, 0
        %476 = vmatprep.subr.bf16.mxu0 0
        %477 = vmatpush1.bf16.msra.mxu0 0
        %478 = vmatprep.subr.bf16.mxu0 0
        %479 = vmatpush1.bf16.msra.mxu0 0
        %480 = vmatprep.subr.bf16.mxu0 0
        %481 = vmatpush1.bf16.msra.mxu0 0
        %482 = vmatprep.subr.bf16.mxu0 0
        %483 = vmatpush1.bf16.msra.mxu0 0
        %484 = vmatprep.subr.bf16.mxu0 0
        %485 = vmatpush1.bf16.msra.mxu0 0
        %486 = vmatprep.subr.bf16.mxu0 0
        %487 = vmatpush1.bf16.msra.mxu0 0
        %488 = vmatprep.subr.bf16.mxu0 0
        %489 = vmatpush1.bf16.msra.mxu0 0
        %490 = vmatprep.subr.bf16.mxu0 %v420
        %491 = vmatpush1.bf16.msra.mxu0 %v419
        %492 = vmatprep.subr.bf16.mxu0 0
        %493 = vmatpush2.bf16.msra.mxu0 0
        %494 = vmatprep.subr.bf16.mxu0 0
        %495 = vmatpush2.bf16.msra.mxu0 0
        %496 = vmatprep.subr.bf16.mxu0 0
        %497 = vmatpush2.bf16.msra.mxu0 0
        %498 = vmatprep.subr.bf16.mxu0 0
        %499 = vmatpush2.bf16.msra.mxu0 0
        %500 = vmatprep.subr.bf16.mxu0 0
        %501 = vmatpush2.bf16.msra.mxu0 0
        %502 = vmatprep.subr.bf16.mxu0 0
        %503 = vmatpush2.bf16.msra.mxu0 0
        %504 = vmatprep.subr.bf16.mxu0 0
        %505 = vmatpush2.bf16.msra.mxu0 0
        %506 = vmatprep.subr.bf16.mxu0 0
        %507 = vmatpush2.bf16.msra.mxu0 0
        %508 = vmatprep.mubr.bf16.mxu0 0
        %509 = vmatmul.mubr.bf16.gmra.mxu0 %v468
        %v510 = vpop.f32.mrf.mxu0
        %v511 = vadd.f32 %v424, %v510
        %v512 = vpop.f32.mrf.mxu0
        %v513 = vadd.f32 %v424, %v512
        %v514 = vpop.f32.mrf.mxu0
        %v515 = vadd.f32 %v429, %v514
        %v516 = vpop.f32.mrf.mxu0
        %v517 = vadd.f32 %v429, %v516
        %518 = vmatprep.mubr.bf16.mxu0 0
        %519 = vmatmul.mubr.bf16.gmra.mxu0 %v471
        %v520 = vpop.f32.mrf.mxu0
        %v521 = vadd.f32 %v434, %v520
        %v522 = vpop.f32.mrf.mxu0
        %v523 = vadd.f32 %v434, %v522
        %v524 = vpop.f32.mrf.mxu0
        %v525 = vadd.f32 %v439, %v524
        %v526 = vpop.f32.mrf.mxu0
        %v527 = vadd.f32 %v439, %v526
        %528 = vmatprep.mubr.bf16.mxu0 0
        %529 = vmatmul.mubr.bf16.gmra.mxu0 %v474
        %v530 = vpop.f32.mrf.mxu0
        %v531 = vadd.f32 %v444, %v530
        %v532 = vpop.f32.mrf.mxu0
        %v533 = vadd.f32 %v444, %v532
        %v534 = vpop.f32.mrf.mxu0
        %v535 = vadd.f32 %v449, %v534
        %v536 = vpop.f32.mrf.mxu0
        %v537 = vadd.f32 %v449, %v536
        %538 = vdwg.mxu0
        %v539 = vmul.f32 %v511, 0.5
        %v540 = vmul.f32 %v513, 0.5
        %v541 = vmul.f32 %v515, 0.5
        %v542 = vmul.f32 %v517, 0.5
        %v543 = vtanh.pop %v539
        %v544 = vtanh.pop %v540
        %v545 = vtanh.pop %v541
        %v546 = vtanh.pop %v542
        %v547 = vmul.f32 %v543, 0.5
        %v548 = vmul.f32 %v544, 0.5
        %v549 = vmul.f32 %v545, 0.5
        %v550 = vmul.f32 %v546, 0.5
        %v551 = vadd.f32 %v547, 0.5
        %v552 = vadd.f32 %v548, 0.5
        %v553 = vadd.f32 %v549, 0.5
        %v554 = vadd.f32 %v550, 0.5
        %v555 = vtanh.pop %v521
        %v556 = vtanh.pop %v523
        %v557 = vtanh.pop %v525
        %v558 = vtanh.pop %v527
        %v559 = vmul.f32 %v531, 0.5
        %v560 = vmul.f32 %v533, 0.5
        %v561 = vmul.f32 %v535, 0.5
        %v562 = vmul.f32 %v537, 0.5
        %v563 = vtanh.pop %v559
        %v564 = vtanh.pop %v560
        %v565 = vtanh.pop %v561
        %v566 = vtanh.pop %v562
        %v567 = vmul.f32 %v563, 0.5
        %v568 = vmul.f32 %v564, 0.5
        %v569 = vmul.f32 %v565, 0.5
        %v570 = vmul.f32 %v566, 0.5
        %v571 = vadd.f32 %v567, 0.5
        %v572 = vadd.f32 %v568, 0.5
        %v573 = vadd.f32 %v569, 0.5
        %v574 = vadd.f32 %v570, 0.5
        %v575 = vmul.f32 %v551, %v555
        %v576 = vmul.f32 %v552, %v556
        %v577 = vmul.f32 %v553, %v557
        %v578 = vmul.f32 %v554, %v558
        %v579 = vtanh.pop %v575
        %v580 = vtanh.pop %v576
        %v581 = vtanh.pop %v577
        %v582 = vtanh.pop %v578
        %v583 = vmul.f32 %v571, %v579
        %v584 = vmul.f32 %v572, %v580
        %v585 = vmul.f32 %v573, %v581
        %v586 = vmul.f32 %v574, %v582
        %v587 = vld [vmem:[%s2 + $0x18] sm:$0xf]
        %v588 = vld [vmem:[%s2 + $0x1c] sm:$0xf]
        %v589 = vld [vmem:[%s2 + $0x20] sm:$0xf]
        %v590 = vld [vmem:[%s2 + $0x24] sm:$0xf]
        %v591 = vld [vmem:[%s2 + $0x28] sm:$0xf]
        %v592 = vld [vmem:[%s2 + $0x2c] sm:$0xf]
        %v593 = vpack.c.bf16 %v585, %v583
        %v594 = vpack.c.bf16 %v586, %v584
        %596 = vset.pattern.permute.xlu0 0
        %597 = vperm.xlu0 %596, %v232
        %v598 = vpop.permute.xlu0 %597
        %601 = vset.pattern.permute.xlu0 0
        %602 = vperm.xlu0 %601, %v233
        %v603 = vpop.permute.xlu0 %602
        %606 = vset.pattern.permute.xlu0 0
        %607 = vperm.xlu0 %606, %v234
        %v608 = vpop.permute.xlu0 %607
        %611 = vset.pattern.permute.xlu0 0
        %612 = vperm.xlu0 %611, %v235
        %v613 = vpop.permute.xlu0 %612
        %616 = vset.pattern.permute.xlu0 0
        %617 = vperm.xlu0 %616, %v236
        %v618 = vpop.permute.xlu0 %617
        %621 = vset.pattern.permute.xlu0 0
        %622 = vperm.xlu0 %621, %v237
        %v623 = vpop.permute.xlu0 %622
        %v631 = vunpack.c.l.b16 %v587
        %v632 = vunpack.c.l.b16 %v588
        %v633 = vunpack.c.l.b16 %v589
        %v634 = vunpack.c.l.b16 %v590
        %v635 = vunpack.c.l.b16 %v591
        %v636 = vunpack.c.l.b16 %v592
        %v637 = vpack.c.b16 %v632, %v631
        %v638 = vpack.c.b16 %v634, %v633
        %v639 = vpack.c.b16 %v636, %v635
        %v641 = vsel %vm466, %v637, 0
        %v644 = vsel %vm466, %v638, 0
        %v647 = vsel %vm466, %v639, 0
        %649 = vmatprep.subr.bf16.mxu0 0
        %650 = vmatpush1.bf16.msra.mxu0 0
        %651 = vmatprep.subr.bf16.mxu0 0
        %652 = vmatpush1.bf16.msra.mxu0 0
        %653 = vmatprep.subr.bf16.mxu0 0
        %654 = vmatpush1.bf16.msra.mxu0 0
        %655 = vmatprep.subr.bf16.mxu0 0
        %656 = vmatpush1.bf16.msra.mxu0 0
        %657 = vmatprep.subr.bf16.mxu0 0
        %658 = vmatpush1.bf16.msra.mxu0 0
        %659 = vmatprep.subr.bf16.mxu0 0
        %660 = vmatpush1.bf16.msra.mxu0 0
        %661 = vmatprep.subr.bf16.mxu0 0
        %662 = vmatpush1.bf16.msra.mxu0 0
        %663 = vmatprep.subr.bf16.mxu0 %v594
        %664 = vmatpush1.bf16.msra.mxu0 %v593
        %665 = vmatprep.subr.bf16.mxu0 0
        %666 = vmatpush2.bf16.msra.mxu0 0
        %667 = vmatprep.subr.bf16.mxu0 0
        %668 = vmatpush2.bf16.msra.mxu0 0
        %669 = vmatprep.subr.bf16.mxu0 0
        %670 = vmatpush2.bf16.msra.mxu0 0
        %671 = vmatprep.subr.bf16.mxu0 0
        %672 = vmatpush2.bf16.msra.mxu0 0
        %673 = vmatprep.subr.bf16.mxu0 0
        %674 = vmatpush2.bf16.msra.mxu0 0
        %675 = vmatprep.subr.bf16.mxu0 0
        %676 = vmatpush2.bf16.msra.mxu0 0
        %677 = vmatprep.subr.bf16.mxu0 0
        %678 = vmatpush2.bf16.msra.mxu0 0
        %679 = vmatprep.subr.bf16.mxu0 0
        %680 = vmatpush2.bf16.msra.mxu0 0
        %681 = vmatprep.mubr.bf16.mxu0 0
        %682 = vmatmul.mubr.bf16.gmra.mxu0 %v641
        %v683 = vpop.f32.mrf.mxu0
        %v684 = vadd.f32 %v598, %v683
        %v685 = vpop.f32.mrf.mxu0
        %v686 = vadd.f32 %v598, %v685
        %v687 = vpop.f32.mrf.mxu0
        %v688 = vadd.f32 %v603, %v687
        %v689 = vpop.f32.mrf.mxu0
        %v690 = vadd.f32 %v603, %v689
        %691 = vmatprep.mubr.bf16.mxu0 0
        %692 = vmatmul.mubr.bf16.gmra.mxu0 %v644
        %v693 = vpop.f32.mrf.mxu0
        %v694 = vadd.f32 %v608, %v693
        %v695 = vpop.f32.mrf.mxu0
        %v696 = vadd.f32 %v608, %v695
        %v697 = vpop.f32.mrf.mxu0
        %v698 = vadd.f32 %v613, %v697
        %v699 = vpop.f32.mrf.mxu0
        %v700 = vadd.f32 %v613, %v699
        %701 = vmatprep.mubr.bf16.mxu0 0
        %702 = vmatmul.mubr.bf16.gmra.mxu0 %v647
        %v703 = vpop.f32.mrf.mxu0
        %v704 = vadd.f32 %v618, %v703
        %v705 = vpop.f32.mrf.mxu0
        %v706 = vadd.f32 %v618, %v705
        %v707 = vpop.f32.mrf.mxu0
        %v708 = vadd.f32 %v623, %v707
        %v709 = vpop.f32.mrf.mxu0
        %v710 = vadd.f32 %v623, %v709
        %711 = vdwg.mxu0
        %v712 = vmul.f32 %v684, 0.5
        %v713 = vmul.f32 %v686, 0.5
        %v714 = vmul.f32 %v688, 0.5
        %v715 = vmul.f32 %v690, 0.5
        %v716 = vtanh.pop %v712
        %v717 = vtanh.pop %v713
        %v718 = vtanh.pop %v714
        %v719 = vtanh.pop %v715
        %v720 = vmul.f32 %v716, 0.5
        %v721 = vmul.f32 %v717, 0.5
        %v722 = vmul.f32 %v718, 0.5
        %v723 = vmul.f32 %v719, 0.5
        %v724 = vadd.f32 %v720, 0.5
        %v725 = vadd.f32 %v721, 0.5
        %v726 = vadd.f32 %v722, 0.5
        %v727 = vadd.f32 %v723, 0.5
        %v728 = vtanh.pop %v694
        %v729 = vtanh.pop %v696
        %v730 = vtanh.pop %v698
        %v731 = vtanh.pop %v700
        %v732 = vmul.f32 %v704, 0.5
        %v733 = vmul.f32 %v706, 0.5
        %v734 = vmul.f32 %v708, 0.5
        %v735 = vmul.f32 %v710, 0.5
        %v736 = vtanh.pop %v732
        %v737 = vtanh.pop %v733
        %v738 = vtanh.pop %v734
        %v739 = vtanh.pop %v735
        %v740 = vmul.f32 %v736, 0.5
        %v741 = vmul.f32 %v737, 0.5
        %v742 = vmul.f32 %v738, 0.5
        %v743 = vmul.f32 %v739, 0.5
        %v744 = vadd.f32 %v740, 0.5
        %v745 = vadd.f32 %v741, 0.5
        %v746 = vadd.f32 %v742, 0.5
        %v747 = vadd.f32 %v743, 0.5
        %v748 = vmul.f32 %v724, %v728
        %v749 = vmul.f32 %v725, %v729
        %v750 = vmul.f32 %v726, %v730
        %v751 = vmul.f32 %v727, %v731
        %v752 = vtanh.pop %v748
        %v753 = vtanh.pop %v749
        %v754 = vtanh.pop %v750
        %v755 = vtanh.pop %v751
        %v756 = vmul.f32 %v744, %v752
        %v757 = vmul.f32 %v745, %v753
        %v758 = vmul.f32 %v746, %v754
        %v759 = vmul.f32 %v747, %v755
        %761 = vset.pattern.permute.xlu0 0
        %762 = vperm.xlu0 %761, %v238
        %v763 = vpop.permute.xlu0 %762
        %766 = vset.pattern.permute.xlu0 0
        %767 = vperm.xlu0 %766, %v239
        %v768 = vpop.permute.xlu0 %767
        %v770 = vmul.f32 %v763, %v756
        %v771 = vmul.f32 %v763, %v757
        %v772 = vmul.f32 %v768, %v758
        %v773 = vmul.f32 %v768, %v759
        %v774 = vadd.f32 %v770, %v772
        %v775 = vrot.slane %v774, 4
        %v776 = vadd.f32 %v774, %v775
        %v777 = vrot.slane %v776, 2
        %v778 = vadd.f32 %v776, %v777
        %v779 = vrot.slane %v778, 1
        %v780 = vadd.f32 %v778, %v779
        %v781 = vadd.f32 %v771, %v773
        %v782 = vrot.slane %v781, 4
        %v783 = vadd.f32 %v781, %v782
        %v784 = vrot.slane %v783, 2
        %v785 = vadd.f32 %v783, %v784
        %v786 = vrot.slane %v785, 1
        %v787 = vadd.f32 %v785, %v786
        %789 = vset.pattern.permute.xlu0 0
        %790 = vperm.xlu0 %789, %v240
        %v791 = vpop.permute.xlu0 %790
        %v793 = vadd.f32 %v780, %v791
        %v794 = vadd.f32 %v787, %v791
        %v795 = vtanh.pop %v793
        %v796 = vtanh.pop %v794
        %v799 = vcombine.low %v795, %v796
        %v801 = vunpack.c.l.s4 1966171168
        %v802 = vunpack.c.0.s8 %v801
        %v803 = vlaneseq
        %v804 = vshrl.u32 %v803, 7
        %v805 = vsub.s32 %v802, %v804
        %v806 = vrot.slane %v799, %v805
        %v808 = vunpack.c.l.s4 1966171168
        %v809 = vunpack.c.0.s8 %v808
        %v810 = vlaneseq
        %v811 = vshrl.u32 %v810, 7
        %v812 = vsub.s32 %v809, %v811
        %v813 = vrot.slane %v806, %v812
        %v815 = vlaneseq
        %vm816 = vcmp.ge.s32.totalorder %v815, 0
        %vm817 = vcmp.lt.s32.totalorder %v815, 256
        %vm818 = vmand %vm816, %vm817
        %819 = vst.msk [vmem:[%s203] sm:$0x3] %vm818, %v813
        %s820 = sand.u32 %s115, 1
        %s821 = scalar_lea.sflag [#allocation3], %s820
        %s822 = sand.u32 %s115, 1
        %s823 = smul.addr %s822, 2
        %s824 = scalar_lea.vmem [#allocation2], %s823
        // Predicated region
        $region37: #{tpu_custom_call.1} parent=35 // pred_check
          %p825 = pneg %p125
        $region38: #{tpu_custom_call.1} parent=35 // pred_check_branch
          %827 = sbr.rel (%p825) target = $region40
        $region39: #{tpu_custom_call.1} parent=35 // pred_region
          %s828 = smul.u32 2, %s18
          %s829 = ssub.s32 3, %s828
          %p830 = scmp.lt.s32.totalorder %s829, 2
          %s831 = scalar_select %p830, %s829, 2
          %s832 = smul.u32 16, %s831
          %s834 = ssub.s32 32, %s832
          %835 = vsyncadd %s821, %s834
          %p836 = scmp.ne.s32.totalorder 0, %s832
          %s837 = smul.addr %s828, 16
          %s838 = scalar_lea.hbm %s4, %s837
          %s839 = sshll.u32 %s831, 4
          %s840 = sshll.u32 %s824, 4
          %s841 = int_to_ptr.vmem [resolvable:$true] %s840
          %843 = dma.vmem_to_hbm [thread:$0]  (%p836), %s841, %s839, %s838, %s821
        $region40: #{tpu_custom_call.1} parent=35 // pred_fallthru
          _
      $region36: #{tpu_custom_call.1} parent=5 // pred_fallthru
        _
      %p844 = scmp.le.s32.totalorder 2, %s13
      // Predicated region
      $region41: #{tpu_custom_call.1} parent=5 // pred_check
        %p845 = pneg %p844
      $region42: #{tpu_custom_call.1} parent=5 // pred_check_branch
        %847 = sbr.rel (%p845) target = $region44
      $region43: #{tpu_custom_call.1} parent=5 // pred_region
        %s848 = ssub.s32 %s13, 2
        // Predicated region
        $region45: #{tpu_custom_call.1} parent=43 // pred_check
          %p849 = pneg %p131
        $region46: #{tpu_custom_call.1} parent=43 // pred_check_branch
          %851 = sbr.rel (%p849) target = $region48
        $region47: #{tpu_custom_call.1} parent=43 // pred_region
          %s852 = sand.u32 %s116, 1
          %s853 = scalar_lea.sflag [#allocation3], %s852
          %s854 = sand.u32 %s116, 1
          %s855 = smul.addr %s854, 2
          %s856 = scalar_lea.vmem [#allocation2], %s855
          %857 = dma.done %s853, 32
        $region48: #{tpu_custom_call.1} parent=43 // pred_fallthru
          _
      $region44: #{tpu_custom_call.1} parent=5 // pred_fallthru
        _
    $region6: #{tpu_custom_call.1} parent=1 // loop_footer
      %s17 = sadd.s32 1, %s13
    $region7: #{tpu_custom_call.1} parent=1 // loop_footer_branch
      %12 = sbr.rel target = $region3
    $region8: #{tpu_custom_call.1} parent=1 // loop_exit
      _
    %858 = vsyncpa [#allocation3], 1
    %s859 = scalar_lea.sflag [#allocation3], 1
    %860 = vsyncpa %s859, 1

</llo_original>
